<compile_context>
chip_gen: v7x
topology: tpu7x:2x2x1
jax: 0.10.0
libtpu: 0.0.40
codegen_flags: <defaults>
</compile_context>

<pallas_src>
import functools

import jax
import jax.numpy as jnp
from jax import lax
from jax.experimental import pallas as pl
from jax.experimental.pallas import tpu as pltpu

EPS = 1e-5                               # nn.InstanceNorm2d default eps
_VMEM_LIMIT_BYTES = 64 * 1024 * 1024     # explicit scoped-VMEM ceiling


def _round_up(x, m):
    return (x + m - 1) // m * m


def _vmem_capacity_bytes():
    try:
        cap = getattr(pltpu.get_tpu_info(), "vmem_capacity_bytes", None)
        if cap:
            return int(cap)
    except Exception:
        pass
    return 64 * 1024 * 1024              # conservative (v7x-sized) fallback


# x-block budget in elements: ~4 MiB f32 blocks on 128 MiB-VMEM chips
# (v5e/v6e), ~2 MiB on 64 MiB chips (v7x).  Real per-step VMEM is ~3-4x this
# (input+output double buffers plus Mosaic's f32 temporaries), which stays
# well inside the explicit 64 MiB scoped limit everywhere.
_MAX_BLOCK_ELEMS = (1024 * 1024 if _vmem_capacity_bytes() >= 96 * 1024 * 1024
                    else 512 * 1024)
_ONEPASS_MAX_HW = _MAX_BLOCK_ELEMS // 8  # largest H*W for the row-resident path
_SPATIAL_TILE = 64 * 1024                # lane-tile for the chunked path


def _row_axis_semantics(num_row_tiles):
    # Row tiles are fully independent: shard them across TensorCores on
    # multi-core chips (v7x has 2 TCs).  CORE_PARALLEL forces the split; it is
    # only requested when there are >= 2 row tiles to split.  Single-TC chips
    # (v5e/v6e) are unaffected.
    core_parallel = getattr(pltpu, "CORE_PARALLEL", None)
    if core_parallel is not None and num_row_tiles >= 2:
        return core_parallel
    return "parallel"


# ---------------------------------------------------------------------------
# Path A: row-resident.  Each grid step owns TM whole rows of the flattened
# (N*C, H*W) problem (one (sample, channel) pair per row).  Stats + normalize
# fused in a single HBM pass.
# ---------------------------------------------------------------------------
def _adain_rows_kernel(x_ref, ss_ref, o_ref, *, inv_hw):
    # x_ref: (TM, HW)   ss_ref: (TM, 2) = [scale + 1, shift]   o_ref: (TM, HW)
    x = x_ref[...].astype(jnp.float32)
    mean = jnp.sum(x, axis=-1, keepdims=True) * inv_hw
    xc = x - mean
    var = jnp.sum(xc * xc, axis=-1, keepdims=True) * inv_hw   # centered: no cancellation
    inv_std = lax.rsqrt(var + EPS)                            # EUP slot (free-ish)
    ss = ss_ref[...].astype(jnp.float32)
    a = inv_std * ss[:, 0:1]                                  # per-row coefficient
    o_ref[...] = (xc * a + ss[:, 1:2]).astype(o_ref.dtype)


# ---------------------------------------------------------------------------
# Path B: H*W too large for a row-resident block.  grid = (rows, phase, space)
#   phase 0: accumulate per-row sum / sum-of-squares into VMEM scratch
#   phase 1: re-read each spatial chunk, normalize, write
# HBM traffic is 2 reads + 1 write — unavoidable once a row no longer fits.
# ---------------------------------------------------------------------------
def _adain_chunked_kernel(x_ref, ss_ref, o_ref, s1_ref, s2_ref, *,
                          inv_hw, hw, ts, need_mask):
    p = pl.program_id(1)
    j = pl.program_id(2)

    @pl.when(jnp.logical_and(p == 0, j == 0))
    def _():
        s1_ref[...] = jnp.zeros_like(s1_ref)
        s2_ref[...] = jnp.zeros_like(s2_ref)

    @pl.when(p == 0)
    def _():
        x = x_ref[...].astype(jnp.float32)
        if need_mask:   # ragged last spatial block: ignore out-of-range lanes
            col = j * ts + lax.broadcasted_iota(jnp.int32, x.shape, 1)
            x = jnp.where(col < hw, x, 0.0)
        s1_ref[...] += jnp.sum(x, axis=-1, keepdims=True)
        s2_ref[...] += jnp.sum(x * x, axis=-1, keepdims=True)

    @pl.when(p == 1)
    def _():
        x = x_ref[...].astype(jnp.float32)
        mean = s1_ref[...] * inv_hw
        # E[x^2] - mean^2 (clamped at 0); a centered form here would need a
        # third HBM pass.  The row-resident path uses the centered form.
        var = jnp.maximum(s2_ref[...] * inv_hw - mean * mean, 0.0)
        inv_std = lax.rsqrt(var + EPS)
        ss = ss_ref[...].astype(jnp.float32)
        a = inv_std * ss[:, 0:1]
        b = ss[:, 1:2] - mean * a
        o_ref[...] = (x * a + b).astype(o_ref.dtype)


def _pick_row_tile(nc, hw):
    """Rows per block for the row-resident path: within the block budget, a
    multiple of 8 (sublanes), and dividing nc whenever possible so no padding
    or ragged tail is needed."""
    cap = _MAX_BLOCK_ELEMS // hw
    if 0 < nc <= cap:
        return nc                        # whole problem in one row strip
    cap = max(8, cap // 8 * 8)
    for tm in range(cap, 7, -8):
        if nc % tm == 0:
            return tm
    return cap   # no divisor: ragged last block; OOB rows dropped on writeback


@functools.partial(jax.jit, static_argnames=("onepass_max_hw", "spatial_tile"))
def _adain_forward_impl(x_nchw, latent, weight, bias, *, onepass_max_hw, spatial_tile):
    N, C, H, W = x_nchw.shape
    HW = H * W
    NC = N * C
    itemsize = jnp.dtype(x_nchw.dtype).itemsize

    # Tiny style Linear stays in XLA (one well-shaped GEMM).
    style = (latent @ weight.T + bias).reshape(N, 2, C)
    scale = style[:, 0, :].reshape(NC, 1) + 1.0
    shift = style[:, 1, :].reshape(NC, 1)
    ss = jnp.concatenate([scale, shift], axis=1).astype(jnp.float32)   # (NC, 2)

    # Free reshape (same row-major layout): rows are (sample, channel) pairs.
    x2 = x_nchw.reshape(NC, HW)

    if HW <= onepass_max_hw:
        # ---- Path A: row-resident, single HBM pass --------------------------
        TM = _pick_row_tile(NC, HW)
        num_rows = pl.cdiv(NC, TM)
        out = pl.pallas_call(
            functools.partial(_adain_rows_kernel, inv_hw=1.0 / HW),
            out_shape=jax.ShapeDtypeStruct((NC, HW), x_nchw.dtype),
            grid_spec=pltpu.PrefetchScalarGridSpec(
                num_scalar_prefetch=0,
                grid=(num_rows,),
                in_specs=[
                    pl.BlockSpec((TM, HW), lambda i: (i, 0)),
                    pl.BlockSpec((TM, 2), lambda i: (i, 0)),
                ],
                out_specs=pl.BlockSpec((TM, HW), lambda i: (i, 0)),
            ),
            compiler_params=pltpu.CompilerParams(
                dimension_semantics=(_row_axis_semantics(num_rows),),
                vmem_limit_bytes=_VMEM_LIMIT_BYTES),
            cost_estimate=pl.CostEstimate(
                flops=7 * NC * HW, transcendentals=NC,
                bytes_accessed=2 * NC * HW * itemsize),
        )(x2, ss)
    else:
        # ---- Path B: spatial chunks + stats/normalize phase axis ------------
        TM = NC if NC < 8 else 8
        TS = min(spatial_tile, _round_up(HW, 128))
        num_rows = pl.cdiv(NC, TM)
        num_space = pl.cdiv(HW, TS)
        out = pl.pallas_call(
            functools.partial(_adain_chunked_kernel, inv_hw=1.0 / HW,
                              hw=HW, ts=TS, need_mask=(HW % TS != 0)),
            out_shape=jax.ShapeDtypeStruct((NC, HW), x_nchw.dtype),
            grid_spec=pltpu.PrefetchScalarGridSpec(
                num_scalar_prefetch=0,
                grid=(num_rows, 2, num_space),
                in_specs=[
                    pl.BlockSpec((TM, TS), lambda i, p, j: (i, j)),
                    pl.BlockSpec((TM, 2), lambda i, p, j: (i, 0)),
                ],
                # During the stats phase the output index stays pinned at
                # (i, 0), so nothing is flushed until the normalize phase has
                # actually written each block (no wasted HBM writes).
                out_specs=pl.BlockSpec((TM, TS), lambda i, p, j: (i, j * p)),
                scratch_shapes=[pltpu.VMEM((TM, 1), jnp.float32),
                                pltpu.VMEM((TM, 1), jnp.float32)],
            ),
            compiler_params=pltpu.CompilerParams(
                dimension_semantics=(_row_axis_semantics(num_rows),
                                     "arbitrary", "arbitrary"),
                vmem_limit_bytes=_VMEM_LIMIT_BYTES),
            cost_estimate=pl.CostEstimate(
                flops=7 * NC * HW, transcendentals=NC,
                bytes_accessed=3 * NC * HW * itemsize),
        )(x2, ss)

    return out.reshape(N, C, H, W)


def adain_forward(x_nchw, latent, weight, bias, *,
                  onepass_max_hw=_ONEPASS_MAX_HW, spatial_tile=_SPATIAL_TILE):
    """AdaIN forward. x: (N, C, H, W), latent: (N, L), weight: (2C, L), bias: (2C,)."""
    return _adain_forward_impl(x_nchw, latent, weight, bias,
                               onepass_max_hw=onepass_max_hw,
                               spatial_tile=spatial_tile)


def adain_reference(x_nchw, latent, weight, bias):
    """Pure-JAX reference matching the PyTorch module semantics."""
    mean = jnp.mean(x_nchw, axis=(2, 3), keepdims=True)
    var = jnp.var(x_nchw, axis=(2, 3), keepdims=True)     # biased, like InstanceNorm2d
    x_norm = (x_nchw - mean) / jnp.sqrt(var + EPS)
    style = latent @ weight.T + bias                      # (N, 2C)
    C = x_nchw.shape[1]
    style = style.reshape(-1, 2, C, 1, 1)
    return x_norm * (style[:, 0] + 1.0) + style[:, 1]


if __name__ == "__main__":
    N, C, H, W = 2, 4, 16, 16
    latent_size = 8

    key = jax.random.PRNGKey(0)
    kx, kl, kw, kb, kx2 = jax.random.split(key, 5)

    x = jax.random.normal(kx, (N, C, H, W), dtype=jnp.float32)
    latent = jax.random.normal(kl, (N, latent_size), dtype=jnp.float32)

    # Deterministic "nn.Linear(latent_size, 2*channels)" params (PyTorch-style init).
    bound = 1.0 / (latent_size ** 0.5)
    weight = jax.random.uniform(kw, (2 * C, latent_size), jnp.float32, -bound, bound)
    bias = jax.random.uniform(kb, (2 * C,), jnp.float32, -bound, bound)

    # Row-resident (single-pass) path.
    out = jax.block_until_ready(adain_forward(x, latent, weight, bias))
    ref = adain_reference(x, latent, weight, bias)
    assert out.shape == (N, C, H, W)
    assert jnp.allclose(out, ref, atol=1e-4, rtol=1e-4), "row-resident path mismatch"

    # Spatial-chunked (large H*W) path, exercised at a small shape by forcing
    # tiny thresholds: H*W = 240 -> two 128-lane tiles with a ragged tail.
    x_b = jax.random.normal(kx2, (N, C, 16, 15), dtype=jnp.float32)
    out_b = jax.block_until_ready(
        adain_forward(x_b, latent, weight, bias, onepass_max_hw=0, spatial_tile=128))
    ref_b = adain_reference(x_b, latent, weight, bias)
    assert jnp.allclose(out_b, ref_b, atol=1e-4, rtol=1e-4), "chunked path mismatch"

    print("KERNEL_OK")
</pallas_src>

<mosaic_0001>
module attributes {stable_mosaic.version = 11 : i64} {
  func.func @_adain_rows_kernel(%arg0: i32, %arg1: memref<8x256xf32, #tpu.memory_space<vmem>>, %arg2: memref<8x2xf32, #tpu.memory_space<vmem>>, %arg3: memref<8x256xf32, #tpu.memory_space<vmem>>) attributes {dimension_semantics = [#tpu.dimension_semantics<parallel>], iteration_bounds = array<i64: 1>, scalar_prefetch = 0 : i64, scratch_operands = 0 : i64, tpu.core_type = #tpu.core_type<tc>, window_params = [{transform_indices = @transform_0, window_bounds = array<i64: 8, 256>}, {transform_indices = @transform_1, window_bounds = array<i64: 8, 2>}, {transform_indices = @transform_2, window_bounds = array<i64: 8, 256>}]} {
    %c0 = arith.constant 0 : index
    %c0_0 = arith.constant 0 : index
    %0 = vector.load %arg1[%c0, %c0_0] : memref<8x256xf32, #tpu.memory_space<vmem>>, vector<8x256xf32>
    %cst = arith.constant dense<0.000000e+00> : vector<8xf32>
    %1 = vector.multi_reduction <add>, %0, %cst [1] : vector<8x256xf32> to vector<8xf32>
    %2 = vector.shape_cast %1 : vector<8xf32> to vector<8x1xf32>
    %cst_1 = arith.constant 3.906250e-03 : f32
    %3 = vector.broadcast %cst_1 : f32 to vector<8x1xf32>
    %4 = arith.mulf %2, %3 : vector<8x1xf32>
    %5 = vector.broadcast %4 : vector<8x1xf32> to vector<8x256xf32>
    %6 = arith.subf %0, %5 : vector<8x256xf32>
    %7 = arith.mulf %6, %6 : vector<8x256xf32>
    %cst_2 = arith.constant dense<0.000000e+00> : vector<8xf32>
    %8 = vector.multi_reduction <add>, %7, %cst_2 [1] : vector<8x256xf32> to vector<8xf32>
    %9 = vector.shape_cast %8 : vector<8xf32> to vector<8x1xf32>
    %cst_3 = arith.constant 3.906250e-03 : f32
    %10 = vector.broadcast %cst_3 : f32 to vector<8x1xf32>
    %11 = arith.mulf %9, %10 : vector<8x1xf32>
    %cst_4 = arith.constant 9.99999974E-6 : f32
    %12 = vector.broadcast %cst_4 : f32 to vector<8x1xf32>
    %13 = arith.addf %11, %12 : vector<8x1xf32>
    %14 = math.rsqrt %13 : vector<8x1xf32>
    %c0_5 = arith.constant 0 : index
    %c0_6 = arith.constant 0 : index
    %15 = vector.load %arg2[%c0_5, %c0_6] : memref<8x2xf32, #tpu.memory_space<vmem>>, vector<8x2xf32>
    %16 = vector.extract_strided_slice %15 {offsets = [0, 0], sizes = [8, 1], strides = [1, 1]} : vector<8x2xf32> to vector<8x1xf32>
    %17 = arith.mulf %14, %16 : vector<8x1xf32>
    %18 = vector.broadcast %17 : vector<8x1xf32> to vector<8x256xf32>
    %19 = arith.mulf %6, %18 : vector<8x256xf32>
    %20 = vector.extract_strided_slice %15 {offsets = [0, 1], sizes = [8, 1], strides = [1, 1]} : vector<8x2xf32> to vector<8x1xf32>
    %21 = vector.broadcast %20 : vector<8x1xf32> to vector<8x256xf32>
    %22 = arith.addf %19, %21 : vector<8x256xf32>
    %c0_7 = arith.constant 0 : index
    %c0_8 = arith.constant 0 : index
    %23 = vector.load %arg3[%c0_7, %c0_8] : memref<8x256xf32, #tpu.memory_space<vmem>>, vector<8x256xf32>
    tpu.vector_store %arg3[%c0_7, %c0_8], %22 {strides = array<i32>} : memref<8x256xf32, #tpu.memory_space<vmem>>, vector<8x256xf32>,
    return
  }
  func.func @transform_0(%arg0: i32) -> (i32, i32) {
    %c0_i32 = arith.constant 0 : i32
    %c0_i32_0 = arith.constant 0 : i32
    return %arg0, %c0_i32 : i32, i32
  }
  func.func @transform_1(%arg0: i32) -> (i32, i32) {
    %c0_i32 = arith.constant 0 : i32
    %c0_i32_0 = arith.constant 0 : i32
    return %arg0, %c0_i32 : i32, i32
  }
  func.func @transform_2(%arg0: i32) -> (i32, i32) {
    %c0_i32 = arith.constant 0 : i32
    %c0_i32_0 = arith.constant 0 : i32
    return %arg0, %c0_i32 : i32, i32
  }
}

</mosaic_0001>

<llo_original>
// kernel: _adain_forward_impl.1
$region0: #{_adain_forward_impl.1}
  #allocation0 [shape = 'u32[]', space=smem, size = 0x4, offset = 0x4, fixed_abs, tag = 'smem constant byte address 0x4 - core index']
  #allocation1 [shape = 'u32[144,128]{1,0:T(1,128)}', space=vmem, size = 0x12000, scoped, tag = 'internal scratch']
  %s0 = inlined_call_operand.hbm [shape: f32[8,256], index: 0, kind: input, shape index: {}]
  %s1 = inlined_call_operand.hbm [shape: f32[8,2], index: 1, kind: input, shape index: {}]
  %s2 = inlined_call_operand.hbm [shape: f32[8,256], index: 2, kind: output, shape index: {}]
  %s3 = sld [smem:[#allocation0]]
  $region26: #{_adain_forward_impl.1} parent=0
    _
  %s5 = ssub.s32 1, %s3
  %s6 = scalar_select 0, %s5, %s3
  $region1: #{_adain_forward_impl.1} parent=0
    #allocation2 [shape = 'u8[8192]{0}', space=vmem, size = 0x2000, scoped, tag = 'input window, operand 0, single buffered']
    #allocation3 [shape = 's32[1]{0}', space=sflag, size = 0x4, scoped, tag = 'scoped memory for _adain_forward_impl.1']
    #allocation4 [shape = 's32[1]{0}', space=sflag, size = 0x4, scoped, tag = 'scoped memory for _adain_forward_impl.1']
    #allocation5 [shape = 'u8[4096]{0}', space=vmem, size = 0x1000, scoped, tag = 'input window, operand 1, single buffered']
    #allocation6 [shape = 's32[1]{0}', space=sflag, size = 0x4, scoped, tag = 'scoped memory for _adain_forward_impl.1']
    #allocation7 [shape = 'u8[8192]{0}', space=vmem, size = 0x2000, scoped, tag = 'output window, operand 0, single buffered']
    %7 = vsyncpa [#allocation3], 0
    %8 = vsyncpa [#allocation6], 0
    %9 = vsyncpa [#allocation4], 0
    // Predicated region
    $region2: #{_adain_forward_impl.1} parent=1 // pred_check
      _
    $region3: #{_adain_forward_impl.1} parent=1 // pred_check_branch
      %11 = sbr.rel (0) target = $region5
    $region4: #{_adain_forward_impl.1} parent=1 // pred_region
      %s13 = ssub.s32 256, 256
      %14 = vsyncadd [#allocation3], %s13
      %s16 = sshll.u32 [#allocation2], 4
      %s17 = int_to_ptr.vmem [resolvable:$true] %s16
      %19 = dma.hbm_to_vmem [thread:$0]  %s0, 256, %s17, [#allocation3]
    $region5: #{_adain_forward_impl.1} parent=1 // pred_fallthru
      _
    // Predicated region
    $region6: #{_adain_forward_impl.1} parent=1 // pred_check
      _
    $region7: #{_adain_forward_impl.1} parent=1 // pred_check_branch
      %21 = sbr.rel (0) target = $region9
    $region8: #{_adain_forward_impl.1} parent=1 // pred_region
      %s23 = ssub.s32 128, 128
      %24 = vsyncadd [#allocation6], %s23
      %s26 = sshll.u32 [#allocation5], 4
      %s27 = int_to_ptr.vmem [resolvable:$true] %s26
      %29 = dma.hbm_to_vmem [thread:$0]  %s1, 128, %s27, [#allocation6]
    $region9: #{_adain_forward_impl.1} parent=1 // pred_fallthru
      _
    // Predicated region
    $region10: #{_adain_forward_impl.1} parent=1 // pred_check
      _
    $region11: #{_adain_forward_impl.1} parent=1 // pred_check_branch
      %31 = sbr.rel (0) target = $region13
    $region12: #{_adain_forward_impl.1} parent=1 // pred_region
      %32 = dma.done [#allocation3], 256
    $region13: #{_adain_forward_impl.1} parent=1 // pred_fallthru
      _
    // Predicated region
    $region14: #{_adain_forward_impl.1} parent=1 // pred_check
      _
    $region15: #{_adain_forward_impl.1} parent=1 // pred_check_branch
      %34 = sbr.rel (0) target = $region17
    $region16: #{_adain_forward_impl.1} parent=1 // pred_region
      %35 = dma.done [#allocation6], 128
    $region17: #{_adain_forward_impl.1} parent=1 // pred_fallthru
      _
    %v36 = vld [vmem:[#allocation2] sm:$0xff]
    %v37 = vld [vmem:[#allocation2 + $0x8] sm:$0xff]
    %v38 = vadd.f32 %v36, %v37
    %39 = vadd.xlane.f32.xlu0 %v38
    %v40 = vpop.xlane.xlu0 %39
    %v41 = vmul.f32 %v40, 0.00390625
    %v42 = vsub.f32 %v36, %v41
    %v43 = vsub.f32 %v37, %v41
    %v44 = vmul.f32 %v42, %v42
    %v45 = vmul.f32 %v43, %v43
    %v46 = vadd.f32 %v44, %v45
    %47 = vadd.xlane.f32.xlu0 %v46
    %v48 = vpop.xlane.xlu0 %47
    %v49 = vmul.f32 %v48, 0.00390625
    %v50 = vadd.f32 %v49, 1e-05
    %v51 = vrsqrt.pop %v50
    %v52 = vld [vmem:[#allocation5] sm:$0xff]
    %v53 = vmul.f32 %v51, %v52
    %55 = vset.pattern.permute.xlu0 0
    %56 = vperm.xlu0 %55, %v53
    %v57 = vpop.permute.xlu0 %56
    %v59 = vmul.f32 %v42, %v57
    %v60 = vmul.f32 %v43, %v57
    %62 = vset.pattern.permute.xlu0 1
    %63 = vperm.xlu0 %62, %v52
    %v64 = vpop.permute.xlu0 %63
    %v66 = vadd.f32 %v59, %v64
    %v67 = vadd.f32 %v60, %v64
    %68 = vst [vmem:[#allocation7] sm:$0xff] %v66
    %69 = vst [vmem:[#allocation7 + $0x8] sm:$0xff] %v67
    // Predicated region
    $region18: #{_adain_forward_impl.1} parent=1 // pred_check
      _
    $region19: #{_adain_forward_impl.1} parent=1 // pred_check_branch
      %71 = sbr.rel (0) target = $region21
    $region20: #{_adain_forward_impl.1} parent=1 // pred_region
      %s73 = ssub.s32 256, 256
      %74 = vsyncadd [#allocation4], %s73
      %s76 = sshll.u32 [#allocation7], 4
      %s77 = int_to_ptr.vmem [resolvable:$true] %s76
      %79 = dma.vmem_to_hbm [thread:$0]  %s77, 256, %s2, [#allocation4]
    $region21: #{_adain_forward_impl.1} parent=1 // pred_fallthru
      _
    // Predicated region
    $region22: #{_adain_forward_impl.1} parent=1 // pred_check
      _
    $region23: #{_adain_forward_impl.1} parent=1 // pred_check_branch
      %81 = sbr.rel (0) target = $region25
    $region24: #{_adain_forward_impl.1} parent=1 // pred_region
      %82 = dma.done [#allocation4], 256
    $region25: #{_adain_forward_impl.1} parent=1 // pred_fallthru
      _
    %83 = vsyncpa [#allocation3], 1
    %84 = vsyncpa [#allocation6], 1
    %85 = vsyncpa [#allocation4], 1

</llo_original>
